<compile_context>
chip_gen: v5e
topology: v5e:2x2
jax: 0.10.0
libtpu: 0.0.40
codegen_flags: <defaults>
</compile_context>

<pallas_src>
import jax
import jax.numpy as jnp
from jax.experimental import pallas as pl
from jax.experimental.pallas import tpu as pltpu


# -----------------------------------------------------------------------------
# Kernel
# -----------------------------------------------------------------------------
def mlp_kernel(x_ref, w1_ref, b1_ref, w2_ref, b2_ref, w3_ref, b3_ref,
               w4_ref, b4_ref, out_ref):
    """Feature-major fused MLP for one batch tile.

    x_ref : (Dp, TB)        bf16   batch on the lane axis
    w_i   : (H_i, H_{i-1})  bf16   PyTorch (out, in) layout, BN-folded
    b_i   : (H_i, 1)        f32    BN-folded
    w4    : (H3, 1)         f32    head weights (used on the VPU)
    b4    : (1, 1)          f32
    out   : (1, TB)         f32    lane-dense probabilities
    """

    def layer(h_bf16, w_ref, b_ref):
        z = jnp.dot(w_ref[...], h_bf16, preferred_element_type=jnp.float32)
        z = z + b_ref[...]                 # (H_i, 1) broadcast across lanes
        return jnp.maximum(z, 0.0)         # ReLU in f32 (BN folded, dropout=id)

    h = layer(x_ref[...], w1_ref, b1_ref)                     # (H1, TB) f32
    h = layer(h.astype(jnp.bfloat16), w2_ref, b2_ref)         # (H2, TB) f32
    h = layer(h.astype(jnp.bfloat16), w3_ref, b3_ref)         # (H3, TB) f32

    # Scalar head: VPU multiply + sublane (XLU) reduce -> lane-dense (1, TB).
    logits = jnp.sum(h * w4_ref[...], axis=0, keepdims=True) + b4_ref[...]
    out_ref[...] = jax.nn.sigmoid(logits)


# -----------------------------------------------------------------------------
# Parameter init (matches the PyTorch module's layouts / init)
# -----------------------------------------------------------------------------
def xavier_uniform(key, shape):
    limit = jnp.sqrt(6.0 / (shape[0] + shape[1]))
    return jax.random.uniform(key, shape, jnp.float32, -limit, limit)


def linear_init(key, in_dim, out_dim):
    """PyTorch nn.Linear default init; weight stored PyTorch-style (out, in)."""
    kw, kb = jax.random.split(key)
    bound = 1.0 / jnp.sqrt(jnp.float32(in_dim))
    w = jax.random.uniform(kw, (out_dim, in_dim), jnp.float32, -bound, bound)
    b = jax.random.uniform(kb, (out_dim,), jnp.float32, -bound, bound)
    return w, b


def init_params(key, n_users, n_items, n_genres, n_languages,
                embedding_dim=128, content_dim=64, hidden_dims=(256, 128, 64),
                randomize_bn=True):
    n_layers = len(hidden_dims)
    keys = jax.random.split(key, 4 + n_layers + 1 + 4 * n_layers)
    params = {
        "user_emb": xavier_uniform(keys[0], (n_users, embedding_dim)),
        "item_emb": xavier_uniform(keys[1], (n_items, embedding_dim)),
        "genre_emb": xavier_uniform(keys[2], (n_genres, content_dim // 2)),
        "lang_emb": xavier_uniform(keys[3], (n_languages, content_dim // 4)),
    }
    in_dim = 2 * embedding_dim + content_dim // 2 + content_dim // 4
    bn_keys = keys[4 + n_layers + 1:]
    for i, hidden in enumerate(hidden_dims, start=1):
        w, b = linear_init(keys[3 + i], in_dim, hidden)
        params[f"w{i}"] = w                     # (out, in)
        params[f"b{i}"] = b                     # (out,)
        # BatchNorm1d eval-mode buffers / affine params.  PyTorch defaults are
        # gamma=1, beta=0, mean=0, var=1; randomize (gamma kept > 0) so the
        # BN-folding path is actually exercised by the correctness check.
        if randomize_bn:
            kg_, kb_, km_, kv_ = jax.random.split(bn_keys[i - 1], 4)
            params[f"bn{i}_gamma"] = jax.random.uniform(kg_, (hidden,), jnp.float32, 0.5, 1.5)
            params[f"bn{i}_beta"] = jax.random.uniform(kb_, (hidden,), jnp.float32, -0.2, 0.2)
            params[f"bn{i}_mean"] = jax.random.uniform(km_, (hidden,), jnp.float32, -0.5, 0.5)
            params[f"bn{i}_var"] = jax.random.uniform(kv_, (hidden,), jnp.float32, 0.5, 1.5)
        else:
            params[f"bn{i}_gamma"] = jnp.ones((hidden,), jnp.float32)
            params[f"bn{i}_beta"] = jnp.zeros((hidden,), jnp.float32)
            params[f"bn{i}_mean"] = jnp.zeros((hidden,), jnp.float32)
            params[f"bn{i}_var"] = jnp.ones((hidden,), jnp.float32)
        in_dim = hidden
    w4, b4 = linear_init(keys[4 + n_layers], in_dim, 1)
    params["w4"] = w4                           # (1, H3)
    params["b4"] = b4                           # (1,)
    return params


# -----------------------------------------------------------------------------
# One-time inference prep: fold eval-BN into Linears, pad K, cast to bf16,
# pre-transpose embedding tables to (dim, rows) bf16 for feature-major gather.
# -----------------------------------------------------------------------------
def pack_params(params, total_dim, dp, eps=1e-5):
    """Fold eval-mode BatchNorm into the Linear weights/biases.

    Module block order is Linear -> ReLU -> BatchNorm -> Dropout, i.e.
    h = relu(x @ W.T + b) * s + t with s = gamma/sqrt(var+eps),
    t = beta - mean*s.  Since s > 0 (gamma > 0 here), s commutes with ReLU and
    folds into (W, b); the additive shift t folds into the *next* layer's bias.
    """
    packed = []
    t_prev = None
    for i in (1, 2, 3):
        w = params[f"w{i}"]                        # (out, in) f32
        b = params[f"b{i}"]                        # (out,)
        if t_prev is not None:
            b = b + w @ t_prev
        s = params[f"bn{i}_gamma"] * jax.lax.rsqrt(params[f"bn{i}_var"] + eps)
        t_prev = params[f"bn{i}_beta"] - params[f"bn{i}_mean"] * s
        w = w * s[:, None]
        b = b * s
        if i == 1:                                 # lane-align the K dim of layer 1
            w = jnp.pad(w, ((0, 0), (0, dp - total_dim)))
        packed.append(w.astype(jnp.bfloat16))
        packed.append(b[:, None].astype(jnp.float32))      # (out, 1)
    w4 = params["w4"]                              # (1, H3)
    b4 = params["b4"] + w4 @ t_prev                # (1,)
    packed.append(w4.T.astype(jnp.float32))        # (H3, 1)
    packed.append(b4.reshape(1, 1).astype(jnp.float32))
    return packed


def _round_up(x, m):
    return ((x + m - 1) // m) * m


def prepare_inference_params(params, eps=1e-5):
    emb_dim = params["user_emb"].shape[1]
    total_dim = 2 * emb_dim + params["genre_emb"].shape[1] + params["lang_emb"].shape[1]
    dp = _round_up(total_dim, 128)
    return {
        # (dim, rows) bf16 tables: the XLA gather/concat directly produces the
        # feature-major bf16 slab the kernel streams.
        "user_emb_t": params["user_emb"].T.astype(jnp.bfloat16),
        "item_emb_t": params["item_emb"].T.astype(jnp.bfloat16),
        "genre_emb_t": params["genre_emb"].T.astype(jnp.bfloat16),
        "lang_emb_t": params["lang_emb"].T.astype(jnp.bfloat16),
        "mlp_args": pack_params(params, total_dim, dp, eps),
        "total_dim": total_dim,
        "dp": dp,
        "hidden": (params["w1"].shape[0], params["w2"].shape[0], params["w3"].shape[0]),
    }


# -----------------------------------------------------------------------------
# Forward pass
# -----------------------------------------------------------------------------
def hybrid_model_forward(prep, user_ids, item_ids, genre_ids, language_ids,
                         *, batch_tile=2048, vmem_limit_bytes=48 * 1024 * 1024):
    B = user_ids.shape[0]
    total_dim, dp = prep["total_dim"], prep["dp"]
    H1, H2, H3 = prep["hidden"]

    # Balance the batch tile against B so padding waste is <= ~128 columns
    # (keeping the 128-lane multiple rule); bp is a multiple of tb.
    n_tiles = max(1, pl.cdiv(B, batch_tile))
    tb = _round_up(pl.cdiv(B, n_tiles), 128)
    bp = _round_up(B, tb)

    # Fused XLA producer: feature-major bf16 gather + concat + pad.  This is the
    # only activation round trip outside the kernel.
    # TODO(synk): a fully in-kernel gather (scalar-prefetched ids + manual DMA
    # row gather from HBM tables) would remove this (dp, bp) slab too, but a
    # per-lane gather is not expressible with rectangular BlockSpecs.
    feats_t = jnp.concatenate(
        [prep["user_emb_t"][:, user_ids], prep["item_emb_t"][:, item_ids],
         prep["genre_emb_t"][:, genre_ids], prep["lang_emb_t"][:, language_ids]],
        axis=0)                                                 # (total_dim, B) bf16
    x_t = jnp.pad(feats_t, ((0, dp - total_dim), (0, bp - B)))  # (dp, bp) bf16

    grid = (bp // tb,)
    const = lambda i: (0, 0)                   # weights stay VMEM-resident
    in_specs = [
        pl.BlockSpec((dp, tb), lambda i: (0, i)),          # x tile (streamed)
        pl.BlockSpec((H1, dp), const), pl.BlockSpec((H1, 1), const),
        pl.BlockSpec((H2, H1), const), pl.BlockSpec((H2, 1), const),
        pl.BlockSpec((H3, H2), const), pl.BlockSpec((H3, 1), const),
        pl.BlockSpec((H3, 1), const),                      # head weights (VPU)
        pl.BlockSpec((1, 1), const),                       # head bias
    ]
    out_specs = pl.BlockSpec((1, tb), lambda i: (0, i))    # lane-dense output

    flops = 2 * bp * (dp * H1 + H1 * H2 + H2 * H3 + H3)
    bytes_accessed = (bp * dp * 2 + bp * 4                      # x (bf16) + out
                      + 2 * (dp * H1 + H1 * H2 + H2 * H3)       # bf16 weights
                      + 4 * (H1 + H2 + H3 + H3 + 1))            # f32 biases/head

    out = pl.pallas_call(
        mlp_kernel,
        out_shape=jax.ShapeDtypeStruct((1, bp), jnp.float32),
        grid=grid,
        in_specs=in_specs,
        out_specs=out_specs,
        compiler_params=pltpu.CompilerParams(
            dimension_semantics=("parallel",),
            vmem_limit_bytes=vmem_limit_bytes),
        cost_estimate=pl.CostEstimate(
            flops=flops, transcendentals=bp, bytes_accessed=bytes_accessed),
    )(x_t, *prep["mlp_args"])

    return out[0, :B]                          # torch.sigmoid(output).squeeze()


# -----------------------------------------------------------------------------
# Pure-JAX reference (unfolded params) for the correctness check
# -----------------------------------------------------------------------------
def hybrid_model_reference(params, user_ids, item_ids, genre_ids, language_ids,
                           eps=1e-5):
    h = jnp.concatenate(
        [params["user_emb"][user_ids], params["item_emb"][item_ids],
         params["genre_emb"][genre_ids], params["lang_emb"][language_ids]],
        axis=1)
    for i in (1, 2, 3):
        h = h @ params[f"w{i}"].T + params[f"b{i}"]
        h = jnp.maximum(h, 0.0)                                  # ReLU
        s = params[f"bn{i}_gamma"] / jnp.sqrt(params[f"bn{i}_var"] + eps)
        h = (h - params[f"bn{i}_mean"]) * s + params[f"bn{i}_beta"]  # BN (eval)
        # Dropout(p=0.3) is identity in eval mode.
    logits = h @ params["w4"].T + params["b4"]
    return jax.nn.sigmoid(logits)[:, 0]


if __name__ == "__main__":
    # Small, module-consistent shapes.
    n_users, n_items, n_genres, n_languages = 50, 40, 10, 5
    embedding_dim, content_dim = 32, 16
    hidden_dims = (64, 32, 16)
    batch = 8

    key = jax.random.PRNGKey(0)
    kp, ku, ki, kg, kl = jax.random.split(key, 5)

    params = init_params(kp, n_users, n_items, n_genres, n_languages,
                         embedding_dim=embedding_dim, content_dim=content_dim,
                         hidden_dims=hidden_dims)

    user_ids = jax.random.randint(ku, (batch,), 0, n_users)
    item_ids = jax.random.randint(ki, (batch,), 0, n_items)
    genre_ids = jax.random.randint(kg, (batch,), 0, n_genres)
    language_ids = jax.random.randint(kl, (batch,), 0, n_languages)

    prep = prepare_inference_params(params)
    out = hybrid_model_forward(prep, user_ids, item_ids, genre_ids, language_ids)
    out = jax.block_until_ready(out)
    ref = hybrid_model_reference(params, user_ids, item_ids, genre_ids, language_ids)

    assert out.shape == (batch,)
    assert bool(jnp.all(jnp.isfinite(out)))
    # bf16-matmul / bf16-embedding precision trade-off (intentional, inference).
    assert bool(jnp.allclose(out, ref, atol=5e-2))
    print("KERNEL_OK")
</pallas_src>

<mosaic_0001>
module attributes {stable_mosaic.version = 11 : i64} {
  func.func @mlp_kernel(%arg0: i32, %arg1: memref<128x128xbf16, #tpu.memory_space<vmem>>, %arg2: memref<64x128xbf16, #tpu.memory_space<vmem>>, %arg3: memref<64x1xf32, #tpu.memory_space<vmem>>, %arg4: memref<32x64xbf16, #tpu.memory_space<vmem>>, %arg5: memref<32x1xf32, #tpu.memory_space<vmem>>, %arg6: memref<16x32xbf16, #tpu.memory_space<vmem>>, %arg7: memref<16x1xf32, #tpu.memory_space<vmem>>, %arg8: memref<16x1xf32, #tpu.memory_space<vmem>>, %arg9: memref<1x1xf32, #tpu.memory_space<vmem>>, %arg10: memref<1x128xf32, #tpu.memory_space<vmem>>) attributes {dimension_semantics = [#tpu.dimension_semantics<parallel>], iteration_bounds = array<i64: 1>, scalar_prefetch = 0 : i64, scratch_operands = 0 : i64, tpu.core_type = #tpu.core_type<tc>, window_params = [{transform_indices = @transform_0, window_bounds = array<i64: 128, 128>}, {pipeline_mode = #tpu.pipeline_mode<synchronous>, transform_indices = @transform_1, window_bounds = array<i64: 64, 128>}, {pipeline_mode = #tpu.pipeline_mode<synchronous>, transform_indices = @transform_2, window_bounds = array<i64: 64, 1>}, {pipeline_mode = #tpu.pipeline_mode<synchronous>, transform_indices = @transform_3, window_bounds = array<i64: 32, 64>}, {pipeline_mode = #tpu.pipeline_mode<synchronous>, transform_indices = @transform_4, window_bounds = array<i64: 32, 1>}, {pipeline_mode = #tpu.pipeline_mode<synchronous>, transform_indices = @transform_5, window_bounds = array<i64: 16, 32>}, {pipeline_mode = #tpu.pipeline_mode<synchronous>, transform_indices = @transform_6, window_bounds = array<i64: 16, 1>}, {pipeline_mode = #tpu.pipeline_mode<synchronous>, transform_indices = @transform_7, window_bounds = array<i64: 16, 1>}, {pipeline_mode = #tpu.pipeline_mode<synchronous>, transform_indices = @transform_8, window_bounds = array<i64: 1, 1>}, {transform_indices = @transform_9, window_bounds = array<i64: 1, 128>}]} {
    %c0 = arith.constant 0 : index
    %c0_0 = arith.constant 0 : index
    %0 = vector.load %arg1[%c0, %c0_0] : memref<128x128xbf16, #tpu.memory_space<vmem>>, vector<128x128xbf16>
    %c0_1 = arith.constant 0 : index
    %c0_2 = arith.constant 0 : index
    %1 = vector.load %arg2[%c0_1, %c0_2] : memref<64x128xbf16, #tpu.memory_space<vmem>>, vector<64x128xbf16>
    %cst = arith.constant dense<0.000000e+00> : vector<64x128xf32>
    %2 = tpu.matmul %1, %0, %cst {dimension_numbers = #tpu.dot_dimension_numbers<[1], [0], [0], [1], [0, 0, 1, 1], [], []>} : vector<64x128xbf16>, vector<128x128xbf16>, vector<64x128xf32> -> vector<64x128xf32>
    %c0_3 = arith.constant 0 : index
    %c0_4 = arith.constant 0 : index
    %3 = vector.load %arg3[%c0_3, %c0_4] : memref<64x1xf32, #tpu.memory_space<vmem>>, vector<64x1xf32>
    %4 = vector.broadcast %3 : vector<64x1xf32> to vector<64x128xf32>
    %5 = arith.addf %2, %4 : vector<64x128xf32>
    %cst_5 = arith.constant 0.000000e+00 : f32
    %6 = vector.broadcast %cst_5 : f32 to vector<64x128xf32>
    %7 = arith.maximumf %5, %6 : vector<64x128xf32>
    %8 = arith.truncf %7 : vector<64x128xf32> to vector<64x128xbf16>
    %c0_6 = arith.constant 0 : index
    %c0_7 = arith.constant 0 : index
    %9 = vector.load %arg4[%c0_6, %c0_7] : memref<32x64xbf16, #tpu.memory_space<vmem>>, vector<32x64xbf16>
    %cst_8 = arith.constant dense<0.000000e+00> : vector<32x128xf32>
    %10 = tpu.matmul %9, %8, %cst_8 {dimension_numbers = #tpu.dot_dimension_numbers<[1], [0], [0], [1], [0, 0, 1, 1], [], []>} : vector<32x64xbf16>, vector<64x128xbf16>, vector<32x128xf32> -> vector<32x128xf32>
    %c0_9 = arith.constant 0 : index
    %c0_10 = arith.constant 0 : index
    %11 = vector.load %arg5[%c0_9, %c0_10] : memref<32x1xf32, #tpu.memory_space<vmem>>, vector<32x1xf32>
    %12 = vector.broadcast %11 : vector<32x1xf32> to vector<32x128xf32>
    %13 = arith.addf %10, %12 : vector<32x128xf32>
    %cst_11 = arith.constant 0.000000e+00 : f32
    %14 = vector.broadcast %cst_11 : f32 to vector<32x128xf32>
    %15 = arith.maximumf %13, %14 : vector<32x128xf32>
    %16 = arith.truncf %15 : vector<32x128xf32> to vector<32x128xbf16>
    %c0_12 = arith.constant 0 : index
    %c0_13 = arith.constant 0 : index
    %17 = vector.load %arg6[%c0_12, %c0_13] : memref<16x32xbf16, #tpu.memory_space<vmem>>, vector<16x32xbf16>
    %cst_14 = arith.constant dense<0.000000e+00> : vector<16x128xf32>
    %18 = tpu.matmul %17, %16, %cst_14 {dimension_numbers = #tpu.dot_dimension_numbers<[1], [0], [0], [1], [0, 0, 1, 1], [], []>} : vector<16x32xbf16>, vector<32x128xbf16>, vector<16x128xf32> -> vector<16x128xf32>
    %c0_15 = arith.constant 0 : index
    %c0_16 = arith.constant 0 : index
    %19 = vector.load %arg7[%c0_15, %c0_16] : memref<16x1xf32, #tpu.memory_space<vmem>>, vector<16x1xf32>
    %20 = vector.broadcast %19 : vector<16x1xf32> to vector<16x128xf32>
    %21 = arith.addf %18, %20 : vector<16x128xf32>
    %cst_17 = arith.constant 0.000000e+00 : f32
    %22 = vector.broadcast %cst_17 : f32 to vector<16x128xf32>
    %23 = arith.maximumf %21, %22 : vector<16x128xf32>
    %c0_18 = arith.constant 0 : index
    %c0_19 = arith.constant 0 : index
    %24 = vector.load %arg8[%c0_18, %c0_19] : memref<16x1xf32, #tpu.memory_space<vmem>>, vector<16x1xf32>
    %25 = vector.broadcast %24 : vector<16x1xf32> to vector<16x128xf32>
    %26 = arith.mulf %23, %25 : vector<16x128xf32>
    %cst_20 = arith.constant dense<0.000000e+00> : vector<128xf32>
    %27 = vector.multi_reduction <add>, %26, %cst_20 [0] : vector<16x128xf32> to vector<128xf32>
    %28 = vector.shape_cast %27 : vector<128xf32> to vector<1x128xf32>
    %c0_21 = arith.constant 0 : index
    %c0_22 = arith.constant 0 : index
    %29 = vector.load %arg9[%c0_21, %c0_22] : memref<1x1xf32, #tpu.memory_space<vmem>>, vector<1x1xf32>
    %30 = vector.broadcast %29 : vector<1x1xf32> to vector<1x128xf32>
    %31 = arith.addf %28, %30 : vector<1x128xf32>
    %32 = arith.negf %31 : vector<1x128xf32>
    %33 = math.exp %32 : vector<1x128xf32>
    %cst_23 = arith.constant 1.000000e+00 : f32
    %34 = vector.broadcast %cst_23 : f32 to vector<1x128xf32>
    %35 = arith.addf %34, %33 : vector<1x128xf32>
    %36 = arith.divf %34, %35 : vector<1x128xf32>
    %c0_24 = arith.constant 0 : index
    %c0_25 = arith.constant 0 : index
    %37 = vector.load %arg10[%c0_24, %c0_25] : memref<1x128xf32, #tpu.memory_space<vmem>>, vector<1x128xf32>
    tpu.vector_store %arg10[%c0_24, %c0_25], %36 {strides = array<i32>} : memref<1x128xf32, #tpu.memory_space<vmem>>, vector<1x128xf32>,
    return
  }
  func.func @transform_0(%arg0: i32) -> (i32, i32) {
    %c0_i32 = arith.constant 0 : i32
    %c0_i32_0 = arith.constant 0 : i32
    return %c0_i32, %arg0 : i32, i32
  }
  func.func @transform_1(%arg0: i32) -> (i32, i32) {
    %c0_i32 = arith.constant 0 : i32
    %c0_i32_0 = arith.constant 0 : i32
    %c0_i32_1 = arith.constant 0 : i32
    return %c0_i32, %c0_i32_0 : i32, i32
  }
  func.func @transform_2(%arg0: i32) -> (i32, i32) {
    %c0_i32 = arith.constant 0 : i32
    %c0_i32_0 = arith.constant 0 : i32
    %c0_i32_1 = arith.constant 0 : i32
    return %c0_i32, %c0_i32_0 : i32, i32
  }
  func.func @transform_3(%arg0: i32) -> (i32, i32) {
    %c0_i32 = arith.constant 0 : i32
    %c0_i32_0 = arith.constant 0 : i32
    %c0_i32_1 = arith.constant 0 : i32
    return %c0_i32, %c0_i32_0 : i32, i32
  }
  func.func @transform_4(%arg0: i32) -> (i32, i32) {
    %c0_i32 = arith.constant 0 : i32
    %c0_i32_0 = arith.constant 0 : i32
    %c0_i32_1 = arith.constant 0 : i32
    return %c0_i32, %c0_i32_0 : i32, i32
  }
  func.func @transform_5(%arg0: i32) -> (i32, i32) {
    %c0_i32 = arith.constant 0 : i32
    %c0_i32_0 = arith.constant 0 : i32
    %c0_i32_1 = arith.constant 0 : i32
    return %c0_i32, %c0_i32_0 : i32, i32
  }
  func.func @transform_6(%arg0: i32) -> (i32, i32) {
    %c0_i32 = arith.constant 0 : i32
    %c0_i32_0 = arith.constant 0 : i32
    %c0_i32_1 = arith.constant 0 : i32
    return %c0_i32, %c0_i32_0 : i32, i32
  }
  func.func @transform_7(%arg0: i32) -> (i32, i32) {
    %c0_i32 = arith.constant 0 : i32
    %c0_i32_0 = arith.constant 0 : i32
    %c0_i32_1 = arith.constant 0 : i32
    return %c0_i32, %c0_i32_0 : i32, i32
  }
  func.func @transform_8(%arg0: i32) -> (i32, i32) {
    %c0_i32 = arith.constant 0 : i32
    %c0_i32_0 = arith.constant 0 : i32
    %c0_i32_1 = arith.constant 0 : i32
    return %c0_i32, %c0_i32_0 : i32, i32
  }
  func.func @transform_9(%arg0: i32) -> (i32, i32) {
    %c0_i32 = arith.constant 0 : i32
    %c0_i32_0 = arith.constant 0 : i32
    return %c0_i32, %arg0 : i32, i32
  }
}

</mosaic_0001>

<llo_original>
// kernel: tpu_custom_call.1
$region0: #{tpu_custom_call.1}
  #allocation0 [shape = 'u32[]', space=smem, size = 0x4, offset = 0x4, fixed_abs, tag = 'smem constant byte address 0x4 - core index']
  #allocation1 [shape = 'u32[72,128]{1,0:T(1,128)}', space=vmem, size = 0x9000, scoped, tag = 'internal scratch']
  #allocation2 [shape = 'f32[1,1]{1,0:T(1,128)S(1)}', space=vmem, size = 0x200, scoped, tag = 'scoped memory for tpu_custom_call.1']
  %s0 = inlined_call_operand.vmem [shape: bf16[128,128], index: 0, kind: input, shape index: {}]
  %s1 = inlined_call_operand.vmem [shape: bf16[64,128], index: 1, kind: input, shape index: {}]
  %s2 = inlined_call_operand.vmem [shape: f32[64,1], index: 2, kind: input, shape index: {}]
  %s3 = inlined_call_operand.vmem [shape: bf16[32,64], index: 3, kind: input, shape index: {}]
  %s4 = inlined_call_operand.vmem [shape: f32[32,1], index: 4, kind: input, shape index: {}]
  %s5 = inlined_call_operand.vmem [shape: bf16[16,32], index: 5, kind: input, shape index: {}]
  %s6 = inlined_call_operand.vmem [shape: f32[16,1], index: 6, kind: input, shape index: {}]
  %s7 = inlined_call_operand.vmem [shape: f32[16,1], index: 7, kind: input, shape index: {}]
  %s8 = inlined_call_operand.<no memory space> [shape: f32[1,1], index: 8, kind: input, shape index: {}]
  %s9 = inlined_call_operand.hbm [shape: f32[1,128], index: 9, kind: output, shape index: {}]
  %s10 = sld [smem:[#allocation0]]
  $region46: #{tpu_custom_call.1} parent=0
    _
  %s12 = ssub.s32 1, %s10
  %s13 = scalar_select 0, %s12, %s10
  %v14 = vstv %s8
  %15 = vst [vmem:[#allocation2] sm:$0x1] %v14
  $region1: #{tpu_custom_call.1} parent=0
    #allocation3 [shape = 'u8[512]{0}', space=vmem, size = 0x400, scoped, tag = 'output window, operand 0, single buffered']
    #allocation4 [shape = 's32[1]{0}', space=sflag, size = 0x4, scoped, tag = 'scoped memory for tpu_custom_call.1']
    %16 = vsyncpa [#allocation4], 0
    // Predicated region
    $region2: #{tpu_custom_call.1} parent=1 // pred_check
      _
    $region3: #{tpu_custom_call.1} parent=1 // pred_check_branch
      %18 = sbr.rel (0) target = $region5
    $region4: #{tpu_custom_call.1} parent=1 // pred_region
      _
    $region5: #{tpu_custom_call.1} parent=1 // pred_fallthru
      _
    // Predicated region
    $region6: #{tpu_custom_call.1} parent=1 // pred_check
      _
    $region7: #{tpu_custom_call.1} parent=1 // pred_check_branch
      %20 = sbr.rel (0) target = $region9
    $region8: #{tpu_custom_call.1} parent=1 // pred_region
      _
    $region9: #{tpu_custom_call.1} parent=1 // pred_fallthru
      _
    // Predicated region
    $region10: #{tpu_custom_call.1} parent=1 // pred_check
      _
    $region11: #{tpu_custom_call.1} parent=1 // pred_check_branch
      %22 = sbr.rel (0) target = $region13
    $region12: #{tpu_custom_call.1} parent=1 // pred_region
      _
    $region13: #{tpu_custom_call.1} parent=1 // pred_fallthru
      _
    // Predicated region
    $region14: #{tpu_custom_call.1} parent=1 // pred_check
      _
    $region15: #{tpu_custom_call.1} parent=1 // pred_check_branch
      %24 = sbr.rel (0) target = $region17
    $region16: #{tpu_custom_call.1} parent=1 // pred_region
      _
    $region17: #{tpu_custom_call.1} parent=1 // pred_fallthru
      _
    // Predicated region
    $region18: #{tpu_custom_call.1} parent=1 // pred_check
      _
    $region19: #{tpu_custom_call.1} parent=1 // pred_check_branch
      %26 = sbr.rel (0) target = $region21
    $region20: #{tpu_custom_call.1} parent=1 // pred_region
      _
    $region21: #{tpu_custom_call.1} parent=1 // pred_fallthru
      _
    // Predicated region
    $region22: #{tpu_custom_call.1} parent=1 // pred_check
      _
    $region23: #{tpu_custom_call.1} parent=1 // pred_check_branch
      %28 = sbr.rel (0) target = $region25
    $region24: #{tpu_custom_call.1} parent=1 // pred_region
      _
    $region25: #{tpu_custom_call.1} parent=1 // pred_fallthru
      _
    // Predicated region
    $region26: #{tpu_custom_call.1} parent=1 // pred_check
      _
    $region27: #{tpu_custom_call.1} parent=1 // pred_check_branch
      %30 = sbr.rel (0) target = $region29
    $region28: #{tpu_custom_call.1} parent=1 // pred_region
      _
    $region29: #{tpu_custom_call.1} parent=1 // pred_fallthru
      _
    // Predicated region
    $region30: #{tpu_custom_call.1} parent=1 // pred_check
      _
    $region31: #{tpu_custom_call.1} parent=1 // pred_check_branch
      %32 = sbr.rel (0) target = $region33
    $region32: #{tpu_custom_call.1} parent=1 // pred_region
      _
    $region33: #{tpu_custom_call.1} parent=1 // pred_fallthru
      _
    // Predicated region
    $region34: #{tpu_custom_call.1} parent=1 // pred_check
      _
    $region35: #{tpu_custom_call.1} parent=1 // pred_check_branch
      %34 = sbr.rel (0) target = $region37
    $region36: #{tpu_custom_call.1} parent=1 // pred_region
      _
    $region37: #{tpu_custom_call.1} parent=1 // pred_fallthru
      _
    %v36 = vld [vmem:[%s0] sm:$0xf]
    %v37 = vld [vmem:[%s0 + $0x4] sm:$0xf]
    %v38 = vld [vmem:[%s0 + $0x8] sm:$0xf]
    %v39 = vld [vmem:[%s0 + $0xc] sm:$0xf]
    %v40 = vld [vmem:[%s0 + $0x10] sm:$0xf]
    %v41 = vld [vmem:[%s0 + $0x14] sm:$0xf]
    %v42 = vld [vmem:[%s0 + $0x18] sm:$0xf]
    %v43 = vld [vmem:[%s0 + $0x1c] sm:$0xf]
    %v44 = vld [vmem:[%s0 + $0x20] sm:$0xf]
    %v45 = vld [vmem:[%s0 + $0x24] sm:$0xf]
    %v46 = vld [vmem:[%s0 + $0x28] sm:$0xf]
    %v47 = vld [vmem:[%s0 + $0x2c] sm:$0xf]
    %v48 = vld [vmem:[%s0 + $0x30] sm:$0xf]
    %v49 = vld [vmem:[%s0 + $0x34] sm:$0xf]
    %v50 = vld [vmem:[%s0 + $0x38] sm:$0xf]
    %v51 = vld [vmem:[%s0 + $0x3c] sm:$0xf]
    %v52 = vld [vmem:[%s1] sm:$0xf]
    %v53 = vld [vmem:[%s1 + $0x4] sm:$0xf]
    %v54 = vld [vmem:[%s1 + $0x8] sm:$0xf]
    %v55 = vld [vmem:[%s1 + $0xc] sm:$0xf]
    %v56 = vld [vmem:[%s1 + $0x10] sm:$0xf]
    %v57 = vld [vmem:[%s1 + $0x14] sm:$0xf]
    %v58 = vld [vmem:[%s1 + $0x18] sm:$0xf]
    %v59 = vld [vmem:[%s1 + $0x1c] sm:$0xf]
    %v60 = vld [vmem:[%s2] sm:$0xff]
    %v61 = vld [vmem:[%s2 + $0x8] sm:$0xff]
    %v62 = vld [vmem:[%s2 + $0x10] sm:$0xff]
    %v63 = vld [vmem:[%s2 + $0x18] sm:$0xff]
    %v64 = vld [vmem:[%s2 + $0x20] sm:$0xff]
    %v65 = vld [vmem:[%s2 + $0x28] sm:$0xff]
    %v66 = vld [vmem:[%s2 + $0x30] sm:$0xff]
    %v67 = vld [vmem:[%s2 + $0x38] sm:$0xff]
    %69 = vset.pattern.permute.xlu0 0
    %70 = vperm.xlu0 %69, %v60
    %v71 = vpop.permute.xlu0 %70
    %74 = vset.pattern.permute.xlu0 0
    %75 = vperm.xlu0 %74, %v61
    %v76 = vpop.permute.xlu0 %75
    %79 = vset.pattern.permute.xlu0 0
    %80 = vperm.xlu0 %79, %v62
    %v81 = vpop.permute.xlu0 %80
    %84 = vset.pattern.permute.xlu0 0
    %85 = vperm.xlu0 %84, %v63
    %v86 = vpop.permute.xlu0 %85
    %89 = vset.pattern.permute.xlu0 0
    %90 = vperm.xlu0 %89, %v64
    %v91 = vpop.permute.xlu0 %90
    %94 = vset.pattern.permute.xlu0 0
    %95 = vperm.xlu0 %94, %v65
    %v96 = vpop.permute.xlu0 %95
    %99 = vset.pattern.permute.xlu0 0
    %100 = vperm.xlu0 %99, %v66
    %v101 = vpop.permute.xlu0 %100
    %104 = vset.pattern.permute.xlu0 0
    %105 = vperm.xlu0 %104, %v67
    %v106 = vpop.permute.xlu0 %105
    %v116 = vunpack.c.l.b16 %v52
    %v117 = vunpack.c.l.b16 %v53
    %v118 = vunpack.c.l.b16 %v54
    %v119 = vunpack.c.l.b16 %v55
    %v120 = vunpack.c.l.b16 %v56
    %v121 = vunpack.c.l.b16 %v57
    %v122 = vunpack.c.l.b16 %v58
    %v123 = vunpack.c.l.b16 %v59
    %v124 = vpack.c.b16 %v117, %v116
    %v125 = vpack.c.b16 %v119, %v118
    %v126 = vpack.c.b16 %v121, %v120
    %v127 = vpack.c.b16 %v123, %v122
    %v148 = vunpack.c.l.b16 %v36
    %v149 = vunpack.c.l.b16 %v37
    %v150 = vunpack.c.l.b16 %v38
    %v151 = vunpack.c.l.b16 %v39
    %v152 = vunpack.c.l.b16 %v40
    %v153 = vunpack.c.l.b16 %v41
    %v154 = vunpack.c.l.b16 %v42
    %v155 = vunpack.c.l.b16 %v43
    %v156 = vunpack.c.l.b16 %v44
    %v157 = vunpack.c.l.b16 %v45
    %v158 = vunpack.c.l.b16 %v46
    %v159 = vunpack.c.l.b16 %v47
    %v160 = vunpack.c.l.b16 %v48
    %v161 = vunpack.c.l.b16 %v49
    %v162 = vunpack.c.l.b16 %v50
    %v163 = vunpack.c.l.b16 %v51
    %v164 = vpack.c.b16 %v149, %v148
    %v165 = vpack.c.b16 %v151, %v150
    %v166 = vpack.c.b16 %v153, %v152
    %v167 = vpack.c.b16 %v155, %v154
    %v168 = vpack.c.b16 %v157, %v156
    %v169 = vpack.c.b16 %v159, %v158
    %v170 = vpack.c.b16 %v161, %v160
    %v171 = vpack.c.b16 %v163, %v162
    %180 = vmatpush.bf16.msra.mxu0 %v171
    %181 = vmatpush.bf16.msra.mxu0 %v170
    %182 = vmatpush.bf16.msra.mxu0 %v169
    %183 = vmatpush.bf16.msra.mxu0 %v168
    %184 = vmatpush.bf16.msra.mxu0 %v167
    %185 = vmatpush.bf16.msra.mxu0 %v166
    %186 = vmatpush.bf16.msra.mxu0 %v165
    %187 = vmatpush.bf16.msra.mxu0 %v164
    %188 = vmatmul.bf16.gmra.mxu0 %v124
    %v189 = vpop.f32.mrf.mxu0
    %v190 = vadd.f32 %v71, %v189
    %v191 = vpop.f32.mrf.mxu0
    %v192 = vadd.f32 %v76, %v191
    %193 = vmatmul.bf16.gmra.mxu0 %v125
    %v194 = vpop.f32.mrf.mxu0
    %v195 = vadd.f32 %v81, %v194
    %v196 = vpop.f32.mrf.mxu0
    %v197 = vadd.f32 %v86, %v196
    %198 = vmatmul.bf16.gmra.mxu0 %v126
    %v199 = vpop.f32.mrf.mxu0
    %v200 = vadd.f32 %v91, %v199
    %v201 = vpop.f32.mrf.mxu0
    %v202 = vadd.f32 %v96, %v201
    %203 = vmatmul.bf16.gmra.mxu0 %v127
    %v204 = vpop.f32.mrf.mxu0
    %v205 = vadd.f32 %v101, %v204
    %v206 = vpop.f32.mrf.mxu0
    %v207 = vadd.f32 %v106, %v206
    %208 = vdwg.mxu0
    %v209 = vmax.f32 %v190, 0.0
    %v210 = vmax.f32 %v192, 0.0
    %v211 = vmax.f32 %v195, 0.0
    %v212 = vmax.f32 %v197, 0.0
    %v213 = vmax.f32 %v200, 0.0
    %v214 = vmax.f32 %v202, 0.0
    %v215 = vmax.f32 %v205, 0.0
    %v216 = vmax.f32 %v207, 0.0
    %v217 = vpack.c.bf16 %v210, %v209
    %v218 = vpack.c.bf16 %v212, %v211
    %v219 = vpack.c.bf16 %v214, %v213
    %v220 = vpack.c.bf16 %v216, %v215
    %v221 = vld [vmem:[%s3] sm:$0xf]
    %v222 = vld [vmem:[%s3 + $0x4] sm:$0xf]
    %v223 = vld [vmem:[%s3 + $0x8] sm:$0xf]
    %v224 = vld [vmem:[%s3 + $0xc] sm:$0xf]
    %v225 = vld [vmem:[%s4] sm:$0xff]
    %v226 = vld [vmem:[%s4 + $0x8] sm:$0xff]
    %v227 = vld [vmem:[%s4 + $0x10] sm:$0xff]
    %v228 = vld [vmem:[%s4 + $0x18] sm:$0xff]
    %230 = vset.pattern.permute.xlu0 0
    %231 = vperm.xlu0 %230, %v225
    %v232 = vpop.permute.xlu0 %231
    %235 = vset.pattern.permute.xlu0 0
    %236 = vperm.xlu0 %235, %v226
    %v237 = vpop.permute.xlu0 %236
    %240 = vset.pattern.permute.xlu0 0
    %241 = vperm.xlu0 %240, %v227
    %v242 = vpop.permute.xlu0 %241
    %245 = vset.pattern.permute.xlu0 0
    %246 = vperm.xlu0 %245, %v228
    %v247 = vpop.permute.xlu0 %246
    %v253 = vunpack.c.l.b16 %v221
    %v254 = vunpack.c.l.b16 %v222
    %v255 = vunpack.c.l.b16 %v223
    %v256 = vunpack.c.l.b16 %v224
    %v257 = vpack.c.b16 %v254, %v253
    %v258 = vpack.c.b16 %v256, %v255
    %vm259 = vcmask 523264
    %v261 = vsel %vm259, %v257, 0
    %v264 = vsel %vm259, %v258, 0
    %266 = vmatpush.bf16.msra.mxu0 0
    %267 = vmatpush.bf16.msra.mxu0 0
    %268 = vmatpush.bf16.msra.mxu0 0
    %269 = vmatpush.bf16.msra.mxu0 0
    %270 = vmatpush.bf16.msra.mxu0 %v220
    %271 = vmatpush.bf16.msra.mxu0 %v219
    %272 = vmatpush.bf16.msra.mxu0 %v218
    %273 = vmatpush.bf16.msra.mxu0 %v217
    %274 = vmatmul.bf16.gmra.mxu0 %v261
    %v275 = vpop.f32.mrf.mxu0
    %v276 = vadd.f32 %v232, %v275
    %v277 = vpop.f32.mrf.mxu0
    %v278 = vadd.f32 %v237, %v277
    %279 = vmatmul.bf16.gmra.mxu0 %v264
    %v280 = vpop.f32.mrf.mxu0
    %v281 = vadd.f32 %v242, %v280
    %v282 = vpop.f32.mrf.mxu0
    %v283 = vadd.f32 %v247, %v282
    %284 = vdwg.mxu0
    %v285 = vmax.f32 %v276, 0.0
    %v286 = vmax.f32 %v278, 0.0
    %v287 = vmax.f32 %v281, 0.0
    %v288 = vmax.f32 %v283, 0.0
    %v289 = vpack.c.bf16 %v286, %v285
    %v290 = vpack.c.bf16 %v288, %v287
    %v291 = vld [vmem:[%s5] sm:$0xf]
    %v292 = vld [vmem:[%s5 + $0x4] sm:$0xf]
    %v293 = vld [vmem:[%s6] sm:$0xff]
    %v294 = vld [vmem:[%s6 + $0x8] sm:$0xff]
    %296 = vset.pattern.permute.xlu0 0
    %297 = vperm.xlu0 %296, %v293
    %v298 = vpop.permute.xlu0 %297
    %301 = vset.pattern.permute.xlu0 0
    %302 = vperm.xlu0 %301, %v294
    %v303 = vpop.permute.xlu0 %302
    %v307 = vunpack.c.l.b16 %v291
    %v308 = vunpack.c.l.b16 %v292
    %v309 = vpack.c.b16 %v308, %v307
    %vm310 = vcmask 261120
    %v312 = vsel %vm310, %v309, 0
    %314 = vmatpush.bf16.msra.mxu0 0
    %315 = vmatpush.bf16.msra.mxu0 0
    %316 = vmatpush.bf16.msra.mxu0 0
    %317 = vmatpush.bf16.msra.mxu0 0
    %318 = vmatpush.bf16.msra.mxu0 0
    %319 = vmatpush.bf16.msra.mxu0 0
    %320 = vmatpush.bf16.msra.mxu0 %v290
    %321 = vmatpush.bf16.msra.mxu0 %v289
    %322 = vmatmul.bf16.gmra.mxu0 %v312
    %v323 = vpop.f32.mrf.mxu0
    %v324 = vadd.f32 %v298, %v323
    %v325 = vpop.f32.mrf.mxu0
    %v326 = vadd.f32 %v303, %v325
    %327 = vdwg.mxu0
    %v328 = vmax.f32 %v324, 0.0
    %v329 = vmax.f32 %v326, 0.0
    %v330 = vld [vmem:[%s7] sm:$0xff]
    %v331 = vld [vmem:[%s7 + $0x8] sm:$0xff]
    %333 = vset.pattern.permute.xlu0 0
    %334 = vperm.xlu0 %333, %v330
    %v335 = vpop.permute.xlu0 %334
    %338 = vset.pattern.permute.xlu0 0
    %339 = vperm.xlu0 %338, %v331
    %v340 = vpop.permute.xlu0 %339
    %v342 = vmul.f32 %v328, %v335
    %v343 = vmul.f32 %v329, %v340
    %v344 = vadd.f32 %v342, %v343
    %v345 = vrot.slane %v344, 4
    %v346 = vadd.f32 %v344, %v345
    %v347 = vrot.slane %v346, 2
    %v348 = vadd.f32 %v346, %v347
    %v349 = vrot.slane %v348, 1
    %v350 = vadd.f32 %v348, %v349
    %v351 = vld [vmem:[#allocation2] sm:$0x1]
    %353 = vset.pattern.permute.xlu0 0
    %354 = vperm.xlu0 %353, %v351
    %v355 = vpop.permute.xlu0 %354
    %v357 = vperm.slane %v355, 0
    %v358 = vadd.f32 %v350, %v357
    %v359 = vxor.u32 %v358, 2147483648
    %v360 = vmul.f32 %v359, 1.442695
    %v361 = vpow.pop %v360
    %v362 = vadd.f32 %v361, 1.0
    %v363 = vrcp.pop %v362
    %v364 = vmul.f32 %v362, %v363
    %v365 = vsub.f32 1.0, %v364
    %v366 = vmul.f32 %v363, %v365
    %v367 = vadd.f32 %v363, %v366
    %vm368 = vweird.f32 %v362
    %vm369 = vweird.f32 %v363
    %vm370 = vmor %vm368, %vm369
    %v371 = vsel %vm370, %v363, %v367
    %v372 = vand.u32 2147483647, %v362
    %vm373 = vcmp.eq.f32.partialorder %v372, 8.507059e+37
    %v374 = vand.u32 %v362, 2147483648
    %v375 = vor.u32 1.1754944e-38, %v374
    %v376 = vsel %vm373, %v375, %v371
    %v377 = vmul.f32 1.0, %v376
    %378 = vst [vmem:[#allocation3] sm:$0x1] %v377
    // Predicated region
    $region38: #{tpu_custom_call.1} parent=1 // pred_check
      _
    $region39: #{tpu_custom_call.1} parent=1 // pred_check_branch
      %380 = sbr.rel (0) target = $region41
    $region40: #{tpu_custom_call.1} parent=1 // pred_region
      %382 = vsyncadd [#allocation4], 0
      %s384 = sshll.u32 [#allocation3], 4
      %s385 = int_to_ptr.vmem [resolvable:$true] %s384
      %s386 = sshll.u32 %s9, 4
      %s387 = int_to_ptr.hbm [resolvable:$true] %s386
      %389 = dma.vmem_to_hbm [thread:$0]  %s385, 16, %s387, [#allocation4]
    $region41: #{tpu_custom_call.1} parent=1 // pred_fallthru
      _
    // Predicated region
    $region42: #{tpu_custom_call.1} parent=1 // pred_check
      _
    $region43: #{tpu_custom_call.1} parent=1 // pred_check_branch
      %391 = sbr.rel (0) target = $region45
    $region44: #{tpu_custom_call.1} parent=1 // pred_region
      %393 = dma.done [#allocation4], 16
    $region45: #{tpu_custom_call.1} parent=1 // pred_fallthru
      _
    %394 = vsyncpa [#allocation4], 1

</llo_original>
